<compile_context>
chip_gen: v7x
topology: tpu7x:2x2x1
jax: 0.10.0
libtpu: 0.0.40
codegen_flags: <defaults>
</compile_context>

<pallas_src>
import jax
import jax.numpy as jnp
from jax.experimental import pallas as pl
from jax.experimental.pallas import tpu as pltpu

_LANE = 128
_VMEM_BUDGET = 40 * (1 << 20)   # conservative planning budget: fits v7x's 64 MiB/TC with headroom


# ----------------------------- small helpers -----------------------------

def _round_up(n, m):
    return ((n + m - 1) // m) * m


def _cdiv(a, b):
    return (a + b - 1) // b


def _feature_pad(D):
    """Lane-aligned feature width: prefer 256 (full v6e/v7x 256x256 MXU tiles) when the extra
    padding is free or cheap, otherwise 128."""
    d128 = _round_up(D, 128)
    d256 = _round_up(D, 256)
    if d256 == d128 or (d256 - D) * 8 <= D:
        return d256
    return d128


def _choose_block_b(B, max_block_b=512):
    """Balanced batch tiles: minimal padding, >=2 grid steps when B allows (feeds both v7x
    TensorCores), capped at max_block_b."""
    n = _cdiv(B, max_block_b)
    if B >= 16:          # only force >=2 steps when each tile still has >= 1 sublane row
        n = max(n, 2)
    return _round_up(_cdiv(B, n), 8)


# ----------------------------- kernels -----------------------------

def _resblock_kernel_fused(x_ref, w1_ref, t1_ref, w2_ref, t2_ref, o_ref):
    """Both folded (Dp, Dp) weights resident in VMEM; one batch tile per grid step."""
    x = x_ref[...]                                                       # (TB, Dp) f32

    # layer1: Linear (BN scale folded into columns, Linear bias + BN shift folded into t1) -> ReLU
    h = jnp.dot(x.astype(w1_ref.dtype), w1_ref[...],
                preferred_element_type=jnp.float32) + t1_ref[...]
    h = jnp.maximum(h, 0.0)

    # layer2 (folded) -> ReLU
    h = jnp.dot(h.astype(w2_ref.dtype), w2_ref[...],
                preferred_element_type=jnp.float32) + t2_ref[...]
    h = jnp.maximum(h, 0.0)

    # dropout = identity in eval mode; residual add
    o_ref[...] = (h + x).astype(o_ref.dtype)


def _resblock_kernel_streamed(x_ref, w1_ref, t1_ref, w2_ref, t2_ref, o_ref, acc_ref):
    """Weight-streaming variant for large Dp: grid axis 1 tiles W1's columns / W2's rows.
    Per step: compute one column-block of h and accumulate its contribution to h @ W2."""
    j = pl.program_id(1)

    @pl.when(j == 0)
    def _():
        acc_ref[...] = jnp.zeros_like(acc_ref)

    x = x_ref[...]                                                       # (TB, Dp) f32, resident over j

    # h[:, block j] = relu(x @ W1[:, block j] + t1[block j])
    h = jnp.dot(x.astype(w1_ref.dtype), w1_ref[...],
                preferred_element_type=jnp.float32) + t1_ref[...]
    h = jnp.maximum(h, 0.0)

    # accumulate K-tiled contribution of matmul-2
    acc_ref[...] += jnp.dot(h.astype(w2_ref.dtype), w2_ref[...],
                            preferred_element_type=jnp.float32)

    @pl.when(j == pl.num_programs(1) - 1)
    def _():
        out = jnp.maximum(acc_ref[...] + t2_ref[...], 0.0) + x
        o_ref[...] = out.astype(o_ref.dtype)


# ----------------------------- wrappers -----------------------------

def fold_params(params, *, eps=1e-5, weight_dtype=jnp.bfloat16):
    """Fold eval-mode BatchNorm into the Linear weights/bias, transpose to (in, out), cast to
    the MXU dtype and zero-pad features to a lane-aligned width.

    Call this ONCE outside the hot path: it is O(D^2) HBM-bound XLA work that should not be
    re-executed on every forward call.
    """
    H, D = params["w1"].shape
    assert D == H, "residual add requires input_size == hidden_layer"
    Dp = _feature_pad(D)

    def fold(w, b, g, be, rm, rv):
        s = g * jax.lax.rsqrt(rv + eps)                      # BN scale
        t = (b - rm) * s + be                                # Linear bias + BN shift, folded
        wf = w.T * s[None, :]                                # (in, out), BN scale in the columns
        wf = jnp.pad(wf, ((0, Dp - wf.shape[0]), (0, Dp - wf.shape[1]))).astype(weight_dtype)
        tf = jnp.pad(t.astype(jnp.float32), (0, Dp - t.shape[0])).reshape(1, Dp)
        return wf, tf

    w1, t1 = fold(params["w1"], params["b1"], params["g1"], params["be1"],
                  params["rm1"], params["rv1"])
    w2, t2 = fold(params["w2"], params["b2"], params["g2"], params["be2"],
                  params["rm2"], params["rv2"])
    return {"w1": w1, "t1": t1, "w2": w2, "t2": t2, "d": D}


def residual_block_apply(x, folded, *, block_b=None, feature_block=None):
    """x: (B, D) float32; folded: output of fold_params."""
    B, D = x.shape
    assert D == folded["d"], "residual add requires input_size == hidden_layer"
    w1, t1, w2, t2 = folded["w1"], folded["t1"], folded["w2"], folded["t2"]
    Dp = w1.shape[0]
    wbytes = jnp.dtype(w1.dtype).itemsize

    # ---- batch tiling (balanced tiles, minimal padding, >=2 steps when B allows) ----
    if block_b is None:
        block_b = _choose_block_b(B)
    block_b = min(block_b, _round_up(B, 8))
    Bp = _round_up(B, block_b)
    nb = Bp // block_b

    # Pad the activation only when the shapes require it (a pad/slice is an extra HBM
    # round-trip of the whole activation tensor).
    xp = x if (Bp, Dp) == (B, D) else jnp.pad(x, ((0, Bp - B), (0, Dp - D)))

    # ---- choose fused (resident weights) vs weight-streaming (feature-tiled) variant ----
    act_bytes = 4 * block_b * Dp * 4                               # double-buffered f32 x + o tiles
    fused_need = act_bytes + 2 * Dp * Dp * wbytes + 8 * Dp * 4     # Buffered(1) weights + shifts

    def _stream_need(tk_):
        # double-buffered (Dp,tk)+(tk,Dp) weight blocks + f32 accumulator + shifts
        return act_bytes + block_b * Dp * 4 + 4 * Dp * tk_ * wbytes + 8 * Dp * 4

    if feature_block is not None:
        assert feature_block % _LANE == 0 and Dp % feature_block == 0
        tk = feature_block
        streamed = tk < Dp
    elif fused_need <= _VMEM_BUDGET:
        tk, streamed = Dp, False
    else:
        streamed = True
        tk = _LANE
        for d in range(Dp - _LANE, _LANE - 1, -_LANE):             # largest divisor of Dp that fits
            if Dp % d == 0 and _stream_need(d) <= _VMEM_BUDGET:
                tk = d
                break

    need = _stream_need(tk) if streamed else fused_need
    vmem_limit = int(min(max(need * 5 // 4, 32 << 20), 128 << 20))

    xo_block = (block_b, Dp)
    out_shape = jax.ShapeDtypeStruct((Bp, Dp), x.dtype)

    def run(single_buffer_resident):
        def resident(shape, index_map):
            if single_buffer_resident:
                # constant-index operands: one buffer, fetched once, stays in VMEM
                return pl.BlockSpec(shape, index_map, pipeline_mode=pl.Buffered(1))
            return pl.BlockSpec(shape, index_map)

        if not streamed:
            grid = (nb,)
            in_specs = [
                pl.BlockSpec(xo_block, lambda i: (i, 0)),          # x tile, streamed over batch
                resident((Dp, Dp), lambda i: (0, 0)),              # folded W1, resident
                resident((1, Dp), lambda i: (0, 0)),               # folded shift 1
                resident((Dp, Dp), lambda i: (0, 0)),              # folded W2, resident
                resident((1, Dp), lambda i: (0, 0)),               # folded shift 2
            ]
            out_specs = pl.BlockSpec(xo_block, lambda i: (i, 0))
            kernel = _resblock_kernel_fused
            scratch = []
            dims = ("parallel",)
        else:
            grid = (nb, Dp // tk)
            in_specs = [
                pl.BlockSpec(xo_block, lambda i, j: (i, 0)),       # x tile, resident across j
                pl.BlockSpec((Dp, tk), lambda i, j: (0, j)),       # streamed W1 column block
                pl.BlockSpec((1, tk), lambda i, j: (0, j)),        # streamed shift-1 block
                pl.BlockSpec((tk, Dp), lambda i, j: (j, 0)),       # streamed W2 row block
                resident((1, Dp), lambda i, j: (0, 0)),            # shift 2, resident
            ]
            out_specs = pl.BlockSpec(xo_block, lambda i, j: (i, 0))
            kernel = _resblock_kernel_streamed
            scratch = [pltpu.VMEM((block_b, Dp), jnp.float32)]
            dims = ("parallel", "arbitrary")

        return pl.pallas_call(
            kernel,
            out_shape=out_shape,
            grid=grid,
            in_specs=in_specs,
            out_specs=out_specs,
            scratch_shapes=scratch,
            compiler_params=pltpu.CompilerParams(
                dimension_semantics=dims,
                vmem_limit_bytes=vmem_limit),
        )(xp, w1, t1, w2, t2)

    try:
        out = run(True)
    except Exception:
        # Graceful fallback for jax versions without pipeline_mode=pl.Buffered(1).
        out = run(False)

    if (Bp, Dp) != (B, D):
        out = out[:B, :D]
    return out


def residual_block(x, params, *, eps=1e-5, weight_dtype=jnp.bfloat16,
                   block_b=None, feature_block=None):
    """Convenience wrapper: folds on every call. For production, call fold_params once and
    reuse the folded weights with residual_block_apply."""
    folded = fold_params(params, eps=eps, weight_dtype=weight_dtype)
    return residual_block_apply(x, folded, block_b=block_b, feature_block=feature_block)


# ----------------------------- reference & test data -----------------------------

def _reference(x, params, eps=1e-5):
    """Pure-JAX reference of the eval-mode forward."""
    def bn(y, g, b, rm, rv):
        return (y - rm) / jnp.sqrt(rv + eps) * g + b
    h = x @ params["w1"].T + params["b1"]
    h = jnp.maximum(bn(h, params["g1"], params["be1"], params["rm1"], params["rv1"]), 0.0)
    h = h @ params["w2"].T + params["b2"]
    h = jnp.maximum(bn(h, params["g2"], params["be2"], params["rm2"], params["rv2"]), 0.0)
    return h + x


def _make_params(key, D):
    ks = jax.random.split(key, 8)
    return {
        "w1": jax.random.normal(ks[0], (D, D), jnp.float32) * 0.1,     # PyTorch (out, in)
        "b1": jax.random.normal(ks[1], (D,), jnp.float32) * 0.1,
        "g1": 1.0 + 0.1 * jax.random.normal(ks[2], (D,), jnp.float32),
        "be1": 0.1 * jax.random.normal(ks[3], (D,), jnp.float32),
        "rm1": 0.05 * jax.random.normal(ks[4], (D,), jnp.float32),
        "rv1": jnp.abs(1.0 + 0.1 * jax.random.normal(ks[5], (D,), jnp.float32)),
        "w2": jax.random.normal(ks[6], (D, D), jnp.float32) * 0.1,
        "b2": jax.random.normal(ks[7], (D,), jnp.float32) * 0.1,
        "g2": jnp.ones((D,), jnp.float32),
        "be2": jnp.zeros((D,), jnp.float32),
        "rm2": jnp.zeros((D,), jnp.float32),
        "rv2": jnp.ones((D,), jnp.float32),
    }


if __name__ == "__main__":
    key = jax.random.PRNGKey(0)
    k_p1, k_x1, k_p2, k_x2 = jax.random.split(key, 4)

    # --- small shape implied by the module (input_size == hidden_layer for the residual) ---
    B, D = 8, 32
    params = _make_params(k_p1, D)
    x = jax.random.normal(k_x1, (B, D), jnp.float32)
    ref = _reference(x, params)

    # f32-weight debug path: bit-tight check of fold + kernel structure.
    out_f32 = residual_block(x, params, weight_dtype=jnp.float32)
    jax.block_until_ready(out_f32)
    assert out_f32.shape == (B, D)
    assert jnp.allclose(out_f32, ref, atol=1e-4, rtol=1e-4), "f32 mismatch vs reference"

    # Default bf16-weight MXU path (f32 accumulation + f32 epilogue).
    out_bf16 = residual_block(x, params)
    jax.block_until_ready(out_bf16)
    assert jnp.allclose(out_bf16, ref, atol=5e-2, rtol=5e-2), "bf16 mismatch vs reference"

    # --- multi-tile batch grid, ragged edges, lane padding (D=160 -> Dp=256), folded once ---
    B2, D2 = 160, 160
    params2 = _make_params(k_p2, D2)
    x2 = jax.random.normal(k_x2, (B2, D2), jnp.float32)
    ref2 = _reference(x2, params2)
    folded2 = fold_params(params2)                      # fold once, reuse across calls
    out2 = residual_block_apply(x2, folded2, block_b=64)      # 3 batch tiles (B padded to 192)
    jax.block_until_ready(out2)
    assert out2.shape == (B2, D2)
    assert jnp.allclose(out2, ref2, atol=5e-2, rtol=5e-2), "gridded bf16 mismatch vs reference"

    # --- weight-streaming (feature-tiled) fallback, forced at a small shape to exercise it ---
    out3 = residual_block_apply(x2, folded2, block_b=64, feature_block=128)
    jax.block_until_ready(out3)
    assert jnp.allclose(out3, ref2, atol=5e-2, rtol=5e-2), "streamed bf16 mismatch vs reference"

    print("KERNEL_OK")
</pallas_src>

<mosaic_0001>
module attributes {stable_mosaic.version = 11 : i64} {
  func.func @_resblock_kernel_fused(%arg0: i32, %arg1: memref<8x128xf32, #tpu.memory_space<vmem>>, %arg2: memref<128x128xf32, #tpu.memory_space<vmem>>, %arg3: memref<1x128xf32, #tpu.memory_space<vmem>>, %arg4: memref<128x128xf32, #tpu.memory_space<vmem>>, %arg5: memref<1x128xf32, #tpu.memory_space<vmem>>, %arg6: memref<8x128xf32, #tpu.memory_space<vmem>>) attributes {dimension_semantics = [#tpu.dimension_semantics<parallel>], iteration_bounds = array<i64: 1>, scalar_prefetch = 0 : i64, scratch_operands = 0 : i64, tpu.core_type = #tpu.core_type<tc>, window_params = [{transform_indices = @transform_0, window_bounds = array<i64: 8, 128>}, {pipeline_mode = #tpu.pipeline_mode<synchronous>, transform_indices = @transform_1, window_bounds = array<i64: 128, 128>}, {pipeline_mode = #tpu.pipeline_mode<synchronous>, transform_indices = @transform_2, window_bounds = array<i64: 1, 128>}, {pipeline_mode = #tpu.pipeline_mode<synchronous>, transform_indices = @transform_3, window_bounds = array<i64: 128, 128>}, {pipeline_mode = #tpu.pipeline_mode<synchronous>, transform_indices = @transform_4, window_bounds = array<i64: 1, 128>}, {transform_indices = @transform_5, window_bounds = array<i64: 8, 128>}]} {
    %c0 = arith.constant 0 : index
    %c0_0 = arith.constant 0 : index
    %0 = vector.load %arg1[%c0, %c0_0] : memref<8x128xf32, #tpu.memory_space<vmem>>, vector<8x128xf32>
    %c0_1 = arith.constant 0 : index
    %c0_2 = arith.constant 0 : index
    %1 = vector.load %arg2[%c0_1, %c0_2] : memref<128x128xf32, #tpu.memory_space<vmem>>, vector<128x128xf32>
    %cst = arith.constant dense<0.000000e+00> : vector<8x128xf32>
    %2 = tpu.matmul %0, %1, %cst {dimension_numbers = #tpu.dot_dimension_numbers<[1], [0], [0], [1], [0, 0, 1, 1], [], []>} : vector<8x128xf32>, vector<128x128xf32>, vector<8x128xf32> -> vector<8x128xf32>
    %c0_3 = arith.constant 0 : index
    %c0_4 = arith.constant 0 : index
    %3 = vector.load %arg3[%c0_3, %c0_4] : memref<1x128xf32, #tpu.memory_space<vmem>>, vector<1x128xf32>
    %4 = vector.broadcast %3 : vector<1x128xf32> to vector<8x128xf32>
    %5 = arith.addf %2, %4 : vector<8x128xf32>
    %cst_5 = arith.constant 0.000000e+00 : f32
    %6 = vector.broadcast %cst_5 : f32 to vector<8x128xf32>
    %7 = arith.maximumf %5, %6 : vector<8x128xf32>
    %c0_6 = arith.constant 0 : index
    %c0_7 = arith.constant 0 : index
    %8 = vector.load %arg4[%c0_6, %c0_7] : memref<128x128xf32, #tpu.memory_space<vmem>>, vector<128x128xf32>
    %cst_8 = arith.constant dense<0.000000e+00> : vector<8x128xf32>
    %9 = tpu.matmul %7, %8, %cst_8 {dimension_numbers = #tpu.dot_dimension_numbers<[1], [0], [0], [1], [0, 0, 1, 1], [], []>} : vector<8x128xf32>, vector<128x128xf32>, vector<8x128xf32> -> vector<8x128xf32>
    %c0_9 = arith.constant 0 : index
    %c0_10 = arith.constant 0 : index
    %10 = vector.load %arg5[%c0_9, %c0_10] : memref<1x128xf32, #tpu.memory_space<vmem>>, vector<1x128xf32>
    %11 = vector.broadcast %10 : vector<1x128xf32> to vector<8x128xf32>
    %12 = arith.addf %9, %11 : vector<8x128xf32>
    %cst_11 = arith.constant 0.000000e+00 : f32
    %13 = vector.broadcast %cst_11 : f32 to vector<8x128xf32>
    %14 = arith.maximumf %12, %13 : vector<8x128xf32>
    %15 = arith.addf %14, %0 : vector<8x128xf32>
    %c0_12 = arith.constant 0 : index
    %c0_13 = arith.constant 0 : index
    %16 = vector.load %arg6[%c0_12, %c0_13] : memref<8x128xf32, #tpu.memory_space<vmem>>, vector<8x128xf32>
    tpu.vector_store %arg6[%c0_12, %c0_13], %15 {strides = array<i32>} : memref<8x128xf32, #tpu.memory_space<vmem>>, vector<8x128xf32>,
    return
  }
  func.func @transform_0(%arg0: i32) -> (i32, i32) {
    %c0_i32 = arith.constant 0 : i32
    %c0_i32_0 = arith.constant 0 : i32
    return %arg0, %c0_i32 : i32, i32
  }
  func.func @transform_1(%arg0: i32) -> (i32, i32) {
    %c0_i32 = arith.constant 0 : i32
    %c0_i32_0 = arith.constant 0 : i32
    %c0_i32_1 = arith.constant 0 : i32
    return %c0_i32, %c0_i32_0 : i32, i32
  }
  func.func @transform_2(%arg0: i32) -> (i32, i32) {
    %c0_i32 = arith.constant 0 : i32
    %c0_i32_0 = arith.constant 0 : i32
    %c0_i32_1 = arith.constant 0 : i32
    return %c0_i32, %c0_i32_0 : i32, i32
  }
  func.func @transform_3(%arg0: i32) -> (i32, i32) {
    %c0_i32 = arith.constant 0 : i32
    %c0_i32_0 = arith.constant 0 : i32
    %c0_i32_1 = arith.constant 0 : i32
    return %c0_i32, %c0_i32_0 : i32, i32
  }
  func.func @transform_4(%arg0: i32) -> (i32, i32) {
    %c0_i32 = arith.constant 0 : i32
    %c0_i32_0 = arith.constant 0 : i32
    %c0_i32_1 = arith.constant 0 : i32
    return %c0_i32, %c0_i32_0 : i32, i32
  }
  func.func @transform_5(%arg0: i32) -> (i32, i32) {
    %c0_i32 = arith.constant 0 : i32
    %c0_i32_0 = arith.constant 0 : i32
    return %arg0, %c0_i32 : i32, i32
  }
}

module attributes {stable_mosaic.version = 11 : i64} {
  func.func @_resblock_kernel_fused(%arg0: i32, %arg1: memref<8x128xf32, #tpu.memory_space<vmem>>, %arg2: memref<128x128xf32, #tpu.memory_space<vmem>>, %arg3: memref<1x128xf32, #tpu.memory_space<vmem>>, %arg4: memref<128x128xf32, #tpu.memory_space<vmem>>, %arg5: memref<1x128xf32, #tpu.memory_space<vmem>>, %arg6: memref<8x128xf32, #tpu.memory_space<vmem>>) attributes {dimension_semantics = [#tpu.dimension_semantics<parallel>], iteration_bounds = array<i64: 1>, scalar_prefetch = 0 : i64, scratch_operands = 0 : i64, tpu.core_type = #tpu.core_type<tc>, window_params = [{transform_indices = @transform_0, window_bounds = array<i64: 8, 128>}, {pipeline_mode = #tpu.pipeline_mode<synchronous>, transform_indices = @transform_1, window_bounds = array<i64: 128, 128>}, {pipeline_mode = #tpu.pipeline_mode<synchronous>, transform_indices = @transform_2, window_bounds = array<i64: 1, 128>}, {pipeline_mode = #tpu.pipeline_mode<synchronous>, transform_indices = @transform_3, window_bounds = array<i64: 128, 128>}, {pipeline_mode = #tpu.pipeline_mode<synchronous>, transform_indices = @transform_4, window_bounds = array<i64: 1, 128>}, {transform_indices = @transform_5, window_bounds = array<i64: 8, 128>}]} {
    %c0 = arith.constant 0 : index
    %c0_0 = arith.constant 0 : index
    %0 = vector.load %arg1[%c0, %c0_0] : memref<8x128xf32, #tpu.memory_space<vmem>>, vector<8x128xf32>
    %c0_1 = arith.constant 0 : index
    %c0_2 = arith.constant 0 : index
    %1 = vector.load %arg2[%c0_1, %c0_2] : memref<128x128xf32, #tpu.memory_space<vmem>>, vector<128x128xf32>
    %cst = arith.constant dense<0.000000e+00> : vector<8x128xf32>
    %2 = tpu.matmul %0, %1, %cst {dimension_numbers = #tpu.dot_dimension_numbers<[1], [0], [0], [1], [0, 0, 1, 1], [], []>} : vector<8x128xf32>, vector<128x128xf32>, vector<8x128xf32> -> vector<8x128xf32>
    %c0_3 = arith.constant 0 : index
    %c0_4 = arith.constant 0 : index
    %3 = vector.load %arg3[%c0_3, %c0_4] : memref<1x128xf32, #tpu.memory_space<vmem>>, vector<1x128xf32>
    %4 = vector.broadcast %3 : vector<1x128xf32> to vector<8x128xf32>
    %5 = arith.addf %2, %4 : vector<8x128xf32>
    %cst_5 = arith.constant 0.000000e+00 : f32
    %6 = vector.broadcast %cst_5 : f32 to vector<8x128xf32>
    %7 = arith.maximumf %5, %6 : vector<8x128xf32>
    %c0_6 = arith.constant 0 : index
    %c0_7 = arith.constant 0 : index
    %8 = vector.load %arg4[%c0_6, %c0_7] : memref<128x128xf32, #tpu.memory_space<vmem>>, vector<128x128xf32>
    %cst_8 = arith.constant dense<0.000000e+00> : vector<8x128xf32>
    %9 = tpu.matmul %7, %8, %cst_8 {dimension_numbers = #tpu.dot_dimension_numbers<[1], [0], [0], [1], [0, 0, 1, 1], [], []>} : vector<8x128xf32>, vector<128x128xf32>, vector<8x128xf32> -> vector<8x128xf32>
    %c0_9 = arith.constant 0 : index
    %c0_10 = arith.constant 0 : index
    %10 = vector.load %arg5[%c0_9, %c0_10] : memref<1x128xf32, #tpu.memory_space<vmem>>, vector<1x128xf32>
    %11 = vector.broadcast %10 : vector<1x128xf32> to vector<8x128xf32>
    %12 = arith.addf %9, %11 : vector<8x128xf32>
    %cst_11 = arith.constant 0.000000e+00 : f32
    %13 = vector.broadcast %cst_11 : f32 to vector<8x128xf32>
    %14 = arith.maximumf %12, %13 : vector<8x128xf32>
    %15 = arith.addf %14, %0 : vector<8x128xf32>
    %c0_12 = arith.constant 0 : index
    %c0_13 = arith.constant 0 : index
    %16 = vector.load %arg6[%c0_12, %c0_13] : memref<8x128xf32, #tpu.memory_space<vmem>>, vector<8x128xf32>
    tpu.vector_store %arg6[%c0_12, %c0_13], %15 {strides = array<i32>} : memref<8x128xf32, #tpu.memory_space<vmem>>, vector<8x128xf32>,
    return
  }
  func.func @transform_0(%arg0: i32) -> (i32, i32) {
    %c0_i32 = arith.constant 0 : i32
    %c0_i32_0 = arith.constant 0 : i32
    return %arg0, %c0_i32 : i32, i32
  }
  func.func @transform_1(%arg0: i32) -> (i32, i32) {
    %c0_i32 = arith.constant 0 : i32
    %c0_i32_0 = arith.constant 0 : i32
    %c0_i32_1 = arith.constant 0 : i32
    return %c0_i32, %c0_i32_0 : i32, i32
  }
  func.func @transform_2(%arg0: i32) -> (i32, i32) {
    %c0_i32 = arith.constant 0 : i32
    %c0_i32_0 = arith.constant 0 : i32
    %c0_i32_1 = arith.constant 0 : i32
    return %c0_i32, %c0_i32_0 : i32, i32
  }
  func.func @transform_3(%arg0: i32) -> (i32, i32) {
    %c0_i32 = arith.constant 0 : i32
    %c0_i32_0 = arith.constant 0 : i32
    %c0_i32_1 = arith.constant 0 : i32
    return %c0_i32, %c0_i32_0 : i32, i32
  }
  func.func @transform_4(%arg0: i32) -> (i32, i32) {
    %c0_i32 = arith.constant 0 : i32
    %c0_i32_0 = arith.constant 0 : i32
    %c0_i32_1 = arith.constant 0 : i32
    return %c0_i32, %c0_i32_0 : i32, i32
  }
  func.func @transform_5(%arg0: i32) -> (i32, i32) {
    %c0_i32 = arith.constant 0 : i32
    %c0_i32_0 = arith.constant 0 : i32
    return %arg0, %c0_i32 : i32, i32
  }
}

</mosaic_0001>

<llo_original>
// kernel: tpu_custom_call.1
$region0: #{tpu_custom_call.1}
  #allocation0 [shape = 'u32[]', space=smem, size = 0x4, offset = 0x4, fixed_abs, tag = 'smem constant byte address 0x4 - core index']
  #allocation1 [shape = 'u32[144,128]{1,0:T(1,128)}', space=vmem, size = 0x12000, scoped, tag = 'internal scratch']
  %s0 = inlined_call_operand.hbm [shape: f32[8,128], index: 0, kind: input, shape index: {}]
  %s1 = inlined_call_operand.hbm [shape: f32[128,128], index: 1, kind: input, shape index: {}]
  %s2 = inlined_call_operand.vmem [shape: f32[1,128], index: 2, kind: input, shape index: {}]
  %s3 = inlined_call_operand.hbm [shape: f32[128,128], index: 3, kind: input, shape index: {}]
  %s4 = inlined_call_operand.vmem [shape: f32[1,128], index: 4, kind: input, shape index: {}]
  %s5 = inlined_call_operand.hbm [shape: f32[8,128], index: 5, kind: output, shape index: {}]
  %s6 = sld [smem:[#allocation0]]
  $region42: #{tpu_custom_call.1} parent=0
    _
  %s8 = ssub.s32 1, %s6
  %s9 = scalar_select 0, %s8, %s6
  $region1: #{tpu_custom_call.1} parent=0
    #allocation2 [shape = 'u8[4096]{0}', space=vmem, size = 0x1000, scoped, tag = 'input window, operand 0, single buffered']
    #allocation3 [shape = 's32[1]{0}', space=sflag, size = 0x4, scoped, tag = 'scoped memory for tpu_custom_call.1']
    #allocation4 [shape = 's32[1]{0}', space=sflag, size = 0x4, scoped, tag = 'scoped memory for tpu_custom_call.1']
    #allocation5 [shape = 'u8[65536]{0}', space=vmem, size = 0x10000, scoped, tag = 'input window, operand 1, single buffered']
    #allocation6 [shape = 's32[1]{0}', space=sflag, size = 0x4, scoped, tag = 'scoped memory for tpu_custom_call.1']
    #allocation7 [shape = 'u8[65536]{0}', space=vmem, size = 0x10000, scoped, tag = 'input window, operand 3, single buffered']
    #allocation8 [shape = 'u8[4096]{0}', space=vmem, size = 0x1000, scoped, tag = 'output window, operand 0, single buffered']
    %10 = vsyncpa [#allocation3], 0
    %11 = vsyncpa [#allocation6], 0
    %12 = vsyncpa [#allocation4], 0
    // Predicated region
    $region2: #{tpu_custom_call.1} parent=1 // pred_check
      _
    $region3: #{tpu_custom_call.1} parent=1 // pred_check_branch
      %14 = sbr.rel (0) target = $region5
    $region4: #{tpu_custom_call.1} parent=1 // pred_region
      %s16 = ssub.s32 128, 128
      %17 = vsyncadd [#allocation3], %s16
      %s19 = sshll.u32 [#allocation2], 4
      %s20 = int_to_ptr.vmem [resolvable:$true] %s19
      %22 = dma.hbm_to_vmem [thread:$0]  %s0, 128, %s20, [#allocation3]
    $region5: #{tpu_custom_call.1} parent=1 // pred_fallthru
      _
    // Predicated region
    $region6: #{tpu_custom_call.1} parent=1 // pred_check
      _
    $region7: #{tpu_custom_call.1} parent=1 // pred_check_branch
      %24 = sbr.rel (0) target = $region9
    $region8: #{tpu_custom_call.1} parent=1 // pred_region
      %s26 = ssub.s32 2048, 2048
      %27 = vsyncadd [#allocation6], %s26
      %s28 = sshll.u32 [#allocation5], 4
      %s29 = int_to_ptr.vmem [resolvable:$true] %s28
      %34 = dma.hbm_to_vmem [thread:$0]  %s1, 2048, %s29, [#allocation6], 128, 128, 8
    $region9: #{tpu_custom_call.1} parent=1 // pred_fallthru
      _
    // Predicated region
    $region10: #{tpu_custom_call.1} parent=1 // pred_check
      _
    $region11: #{tpu_custom_call.1} parent=1 // pred_check_branch
      %36 = sbr.rel (0) target = $region13
    $region12: #{tpu_custom_call.1} parent=1 // pred_region
      _
    $region13: #{tpu_custom_call.1} parent=1 // pred_fallthru
      _
    // Predicated region
    $region14: #{tpu_custom_call.1} parent=1 // pred_check
      _
    $region15: #{tpu_custom_call.1} parent=1 // pred_check_branch
      %38 = sbr.rel (0) target = $region17
    $region16: #{tpu_custom_call.1} parent=1 // pred_region
      %s40 = ssub.s32 2048, 2048
      %41 = vsyncadd [#allocation6], %s40
      %s42 = sshll.u32 [#allocation7], 4
      %s43 = int_to_ptr.vmem [resolvable:$true] %s42
      %48 = dma.hbm_to_vmem [thread:$0]  %s3, 2048, %s43, [#allocation6], 128, 128, 8
    $region17: #{tpu_custom_call.1} parent=1 // pred_fallthru
      _
    // Predicated region
    $region18: #{tpu_custom_call.1} parent=1 // pred_check
      _
    $region19: #{tpu_custom_call.1} parent=1 // pred_check_branch
      %50 = sbr.rel (0) target = $region21
    $region20: #{tpu_custom_call.1} parent=1 // pred_region
      _
    $region21: #{tpu_custom_call.1} parent=1 // pred_fallthru
      _
    // Predicated region
    $region22: #{tpu_custom_call.1} parent=1 // pred_check
      _
    $region23: #{tpu_custom_call.1} parent=1 // pred_check_branch
      %52 = sbr.rel (0) target = $region25
    $region24: #{tpu_custom_call.1} parent=1 // pred_region
      %53 = dma.done [#allocation3], 128
    $region25: #{tpu_custom_call.1} parent=1 // pred_fallthru
      _
    // Predicated region
    $region26: #{tpu_custom_call.1} parent=1 // pred_check
      _
    $region27: #{tpu_custom_call.1} parent=1 // pred_check_branch
      %55 = sbr.rel (0) target = $region29
    $region28: #{tpu_custom_call.1} parent=1 // pred_region
      %56 = dma.done [#allocation6], 2048
    $region29: #{tpu_custom_call.1} parent=1 // pred_fallthru
      _
    // Predicated region
    $region30: #{tpu_custom_call.1} parent=1 // pred_check
      _
    $region31: #{tpu_custom_call.1} parent=1 // pred_check_branch
      %58 = sbr.rel (0) target = $region33
    $region32: #{tpu_custom_call.1} parent=1 // pred_region
      %59 = dma.done [#allocation6], 2048
    $region33: #{tpu_custom_call.1} parent=1 // pred_fallthru
      _
    %v60 = vld [vmem:[#allocation2] sm:$0xff]
    %v61 = vld [vmem:[#allocation5] sm:$0xff]
    %v62 = vld [vmem:[#allocation5 + $0x8] sm:$0xff]
    %v63 = vld [vmem:[#allocation5 + $0x10] sm:$0xff]
    %v64 = vld [vmem:[#allocation5 + $0x18] sm:$0xff]
    %v65 = vld [vmem:[#allocation5 + $0x20] sm:$0xff]
    %v66 = vld [vmem:[#allocation5 + $0x28] sm:$0xff]
    %v67 = vld [vmem:[#allocation5 + $0x30] sm:$0xff]
    %v68 = vld [vmem:[#allocation5 + $0x38] sm:$0xff]
    %v69 = vld [vmem:[#allocation5 + $0x40] sm:$0xff]
    %v70 = vld [vmem:[#allocation5 + $0x48] sm:$0xff]
    %v71 = vld [vmem:[#allocation5 + $0x50] sm:$0xff]
    %v72 = vld [vmem:[#allocation5 + $0x58] sm:$0xff]
    %v73 = vld [vmem:[#allocation5 + $0x60] sm:$0xff]
    %v74 = vld [vmem:[#allocation5 + $0x68] sm:$0xff]
    %v75 = vld [vmem:[#allocation5 + $0x70] sm:$0xff]
    %v76 = vld [vmem:[#allocation5 + $0x78] sm:$0xff]
    %v77 = vld [vmem:[%s2] sm:$0x1]
    %v79 = vlaneseq
    %v80 = vshrl.u32 %v79, 7
    %v81 = vsub.s32 0, %v80
    %v82 = vrot.slane %v77, %v81
    %84 = vmatprep.subr.mxu0 0.0
    %85 = vmatpush1.msra.mxu0 %v61
    %86 = vmatprep.subr.mxu0 0.0
    %87 = vmatpush1.msra.mxu0 %v62
    %88 = vmatprep.subr.mxu0 0.0
    %89 = vmatpush1.msra.mxu0 %v63
    %90 = vmatprep.subr.mxu0 0.0
    %91 = vmatpush1.msra.mxu0 %v64
    %92 = vmatprep.subr.mxu0 0.0
    %93 = vmatpush1.msra.mxu0 %v65
    %94 = vmatprep.subr.mxu0 0.0
    %95 = vmatpush1.msra.mxu0 %v66
    %96 = vmatprep.subr.mxu0 0.0
    %97 = vmatpush1.msra.mxu0 %v67
    %98 = vmatprep.subr.mxu0 0.0
    %99 = vmatpush1.msra.mxu0 %v68
    %100 = vmatprep.subr.mxu0 0.0
    %101 = vmatpush1.msra.mxu0 %v69
    %102 = vmatprep.subr.mxu0 0.0
    %103 = vmatpush1.msra.mxu0 %v70
    %104 = vmatprep.subr.mxu0 0.0
    %105 = vmatpush1.msra.mxu0 %v71
    %106 = vmatprep.subr.mxu0 0.0
    %107 = vmatpush1.msra.mxu0 %v72
    %108 = vmatprep.subr.mxu0 0.0
    %109 = vmatpush1.msra.mxu0 %v73
    %110 = vmatprep.subr.mxu0 0.0
    %111 = vmatpush1.msra.mxu0 %v74
    %112 = vmatprep.subr.mxu0 0.0
    %113 = vmatpush1.msra.mxu0 %v75
    %114 = vmatprep.subr.mxu0 0.0
    %115 = vmatpush1.msra.mxu0 %v76
    %116 = vmatprep.subr.mxu0 0.0
    %117 = vmatpush1.msra.mxu0 0.0
    %118 = vmatprep.subr.mxu0 0.0
    %119 = vmatpush1.msra.mxu0 0.0
    %120 = vmatprep.subr.mxu0 0.0
    %121 = vmatpush1.msra.mxu0 0.0
    %122 = vmatprep.subr.mxu0 0.0
    %123 = vmatpush1.msra.mxu0 0.0
    %124 = vmatprep.subr.mxu0 0.0
    %125 = vmatpush1.msra.mxu0 0.0
    %126 = vmatprep.subr.mxu0 0.0
    %127 = vmatpush1.msra.mxu0 0.0
    %128 = vmatprep.subr.mxu0 0.0
    %129 = vmatpush1.msra.mxu0 0.0
    %130 = vmatprep.subr.mxu0 0.0
    %131 = vmatpush1.msra.mxu0 0.0
    %132 = vmatprep.subr.mxu0 0.0
    %133 = vmatpush1.msra.mxu0 0.0
    %134 = vmatprep.subr.mxu0 0.0
    %135 = vmatpush1.msra.mxu0 0.0
    %136 = vmatprep.subr.mxu0 0.0
    %137 = vmatpush1.msra.mxu0 0.0
    %138 = vmatprep.subr.mxu0 0.0
    %139 = vmatpush1.msra.mxu0 0.0
    %140 = vmatprep.subr.mxu0 0.0
    %141 = vmatpush1.msra.mxu0 0.0
    %142 = vmatprep.subr.mxu0 0.0
    %143 = vmatpush1.msra.mxu0 0.0
    %144 = vmatprep.subr.mxu0 0.0
    %145 = vmatpush1.msra.mxu0 0.0
    %146 = vmatprep.subr.mxu0 0.0
    %147 = vmatpush1.msra.mxu0 0.0
    %148 = vmatprep.mubr.f32.mxu0 0.0
    %149 = vmatmul.mubr.f32.gmra.mrb[0].mxu0 %v60
    %v150 = vpop.f32.mrb[0].mxu0
    %v151 = vadd.f32 %v82, %v150
    %v152 = vpop.f32.mrb[0].mxu0
    %153 = vdwg.mxu0
    %v154 = vmax.f32 %v151, 0.0
    %v155 = vld [vmem:[#allocation7] sm:$0xff]
    %v156 = vld [vmem:[#allocation7 + $0x8] sm:$0xff]
    %v157 = vld [vmem:[#allocation7 + $0x10] sm:$0xff]
    %v158 = vld [vmem:[#allocation7 + $0x18] sm:$0xff]
    %v159 = vld [vmem:[#allocation7 + $0x20] sm:$0xff]
    %v160 = vld [vmem:[#allocation7 + $0x28] sm:$0xff]
    %v161 = vld [vmem:[#allocation7 + $0x30] sm:$0xff]
    %v162 = vld [vmem:[#allocation7 + $0x38] sm:$0xff]
    %v163 = vld [vmem:[#allocation7 + $0x40] sm:$0xff]
    %v164 = vld [vmem:[#allocation7 + $0x48] sm:$0xff]
    %v165 = vld [vmem:[#allocation7 + $0x50] sm:$0xff]
    %v166 = vld [vmem:[#allocation7 + $0x58] sm:$0xff]
    %v167 = vld [vmem:[#allocation7 + $0x60] sm:$0xff]
    %v168 = vld [vmem:[#allocation7 + $0x68] sm:$0xff]
    %v169 = vld [vmem:[#allocation7 + $0x70] sm:$0xff]
    %v170 = vld [vmem:[#allocation7 + $0x78] sm:$0xff]
    %v171 = vld [vmem:[%s4] sm:$0x1]
    %v173 = vlaneseq
    %v174 = vshrl.u32 %v173, 7
    %v175 = vsub.s32 0, %v174
    %v176 = vrot.slane %v171, %v175
    %178 = vmatprep.subr.mxu0 0.0
    %179 = vmatpush1.msra.mxu0 %v155
    %180 = vmatprep.subr.mxu0 0.0
    %181 = vmatpush1.msra.mxu0 %v156
    %182 = vmatprep.subr.mxu0 0.0
    %183 = vmatpush1.msra.mxu0 %v157
    %184 = vmatprep.subr.mxu0 0.0
    %185 = vmatpush1.msra.mxu0 %v158
    %186 = vmatprep.subr.mxu0 0.0
    %187 = vmatpush1.msra.mxu0 %v159
    %188 = vmatprep.subr.mxu0 0.0
    %189 = vmatpush1.msra.mxu0 %v160
    %190 = vmatprep.subr.mxu0 0.0
    %191 = vmatpush1.msra.mxu0 %v161
    %192 = vmatprep.subr.mxu0 0.0
    %193 = vmatpush1.msra.mxu0 %v162
    %194 = vmatprep.subr.mxu0 0.0
    %195 = vmatpush1.msra.mxu0 %v163
    %196 = vmatprep.subr.mxu0 0.0
    %197 = vmatpush1.msra.mxu0 %v164
    %198 = vmatprep.subr.mxu0 0.0
    %199 = vmatpush1.msra.mxu0 %v165
    %200 = vmatprep.subr.mxu0 0.0
    %201 = vmatpush1.msra.mxu0 %v166
    %202 = vmatprep.subr.mxu0 0.0
    %203 = vmatpush1.msra.mxu0 %v167
    %204 = vmatprep.subr.mxu0 0.0
    %205 = vmatpush1.msra.mxu0 %v168
    %206 = vmatprep.subr.mxu0 0.0
    %207 = vmatpush1.msra.mxu0 %v169
    %208 = vmatprep.subr.mxu0 0.0
    %209 = vmatpush1.msra.mxu0 %v170
    %210 = vmatprep.subr.mxu0 0.0
    %211 = vmatpush1.msra.mxu0 0.0
    %212 = vmatprep.subr.mxu0 0.0
    %213 = vmatpush1.msra.mxu0 0.0
    %214 = vmatprep.subr.mxu0 0.0
    %215 = vmatpush1.msra.mxu0 0.0
    %216 = vmatprep.subr.mxu0 0.0
    %217 = vmatpush1.msra.mxu0 0.0
    %218 = vmatprep.subr.mxu0 0.0
    %219 = vmatpush1.msra.mxu0 0.0
    %220 = vmatprep.subr.mxu0 0.0
    %221 = vmatpush1.msra.mxu0 0.0
    %222 = vmatprep.subr.mxu0 0.0
    %223 = vmatpush1.msra.mxu0 0.0
    %224 = vmatprep.subr.mxu0 0.0
    %225 = vmatpush1.msra.mxu0 0.0
    %226 = vmatprep.subr.mxu0 0.0
    %227 = vmatpush1.msra.mxu0 0.0
    %228 = vmatprep.subr.mxu0 0.0
    %229 = vmatpush1.msra.mxu0 0.0
    %230 = vmatprep.subr.mxu0 0.0
    %231 = vmatpush1.msra.mxu0 0.0
    %232 = vmatprep.subr.mxu0 0.0
    %233 = vmatpush1.msra.mxu0 0.0
    %234 = vmatprep.subr.mxu0 0.0
    %235 = vmatpush1.msra.mxu0 0.0
    %236 = vmatprep.subr.mxu0 0.0
    %237 = vmatpush1.msra.mxu0 0.0
    %238 = vmatprep.subr.mxu0 0.0
    %239 = vmatpush1.msra.mxu0 0.0
    %240 = vmatprep.subr.mxu0 0.0
    %241 = vmatpush1.msra.mxu0 0.0
    %242 = vmatprep.mubr.f32.mxu0 0.0
    %243 = vmatmul.mubr.f32.gmra.mrb[0].mxu0 %v154
    %v244 = vpop.f32.mrb[0].mxu0
    %v245 = vadd.f32 %v176, %v244
    %v246 = vpop.f32.mrb[0].mxu0
    %247 = vdwg.mxu0
    %v248 = vmax.f32 %v245, 0.0
    %v249 = vadd.f32 %v248, %v60
    %250 = vst [vmem:[#allocation8] sm:$0xff] %v249
    // Predicated region
    $region34: #{tpu_custom_call.1} parent=1 // pred_check
      _
    $region35: #{tpu_custom_call.1} parent=1 // pred_check_branch
      %252 = sbr.rel (0) target = $region37
    $region36: #{tpu_custom_call.1} parent=1 // pred_region
      %s254 = ssub.s32 128, 128
      %255 = vsyncadd [#allocation4], %s254
      %s257 = sshll.u32 [#allocation8], 4
      %s258 = int_to_ptr.vmem [resolvable:$true] %s257
      %260 = dma.vmem_to_hbm [thread:$0]  %s258, 128, %s5, [#allocation4]
    $region37: #{tpu_custom_call.1} parent=1 // pred_fallthru
      _
    // Predicated region
    $region38: #{tpu_custom_call.1} parent=1 // pred_check
      _
    $region39: #{tpu_custom_call.1} parent=1 // pred_check_branch
      %262 = sbr.rel (0) target = $region41
    $region40: #{tpu_custom_call.1} parent=1 // pred_region
      %263 = dma.done [#allocation4], 128
    $region41: #{tpu_custom_call.1} parent=1 // pred_fallthru
      _
    %264 = vsyncpa [#allocation3], 1
    %265 = vsyncpa [#allocation6], 1
    %266 = vsyncpa [#allocation4], 1

// kernel: tpu_custom_call.1
$region0: #{tpu_custom_call.1}
  #allocation0 [shape = 'u32[]', space=smem, size = 0x4, offset = 0x4, fixed_abs, tag = 'smem constant byte address 0x4 - core index']
  #allocation1 [shape = 'u32[144,128]{1,0:T(1,128)}', space=vmem, size = 0x12000, scoped, tag = 'internal scratch']
  %s0 = inlined_call_operand.hbm [shape: f32[8,128], index: 0, kind: input, shape index: {}]
  %s1 = inlined_call_operand.hbm [shape: f32[128,128], index: 1, kind: input, shape index: {}]
  %s2 = inlined_call_operand.vmem [shape: f32[1,128], index: 2, kind: input, shape index: {}]
  %s3 = inlined_call_operand.hbm [shape: f32[128,128], index: 3, kind: input, shape index: {}]
  %s4 = inlined_call_operand.vmem [shape: f32[1,128], index: 4, kind: input, shape index: {}]
  %s5 = inlined_call_operand.hbm [shape: f32[8,128], index: 5, kind: output, shape index: {}]
  %s6 = sld [smem:[#allocation0]]
  $region42: #{tpu_custom_call.1} parent=0
    _
  %s8 = ssub.s32 1, %s6
  %s9 = scalar_select 0, %s8, %s6
  $region1: #{tpu_custom_call.1} parent=0
    #allocation2 [shape = 'u8[4096]{0}', space=vmem, size = 0x1000, scoped, tag = 'input window, operand 0, single buffered']
    #allocation3 [shape = 's32[1]{0}', space=sflag, size = 0x4, scoped, tag = 'scoped memory for tpu_custom_call.1']
    #allocation4 [shape = 's32[1]{0}', space=sflag, size = 0x4, scoped, tag = 'scoped memory for tpu_custom_call.1']
    #allocation5 [shape = 'u8[65536]{0}', space=vmem, size = 0x10000, scoped, tag = 'input window, operand 1, single buffered']
    #allocation6 [shape = 's32[1]{0}', space=sflag, size = 0x4, scoped, tag = 'scoped memory for tpu_custom_call.1']
    #allocation7 [shape = 'u8[65536]{0}', space=vmem, size = 0x10000, scoped, tag = 'input window, operand 3, single buffered']
    #allocation8 [shape = 'u8[4096]{0}', space=vmem, size = 0x1000, scoped, tag = 'output window, operand 0, single buffered']
    %10 = vsyncpa [#allocation3], 0
    %11 = vsyncpa [#allocation6], 0
    %12 = vsyncpa [#allocation4], 0
    // Predicated region
    $region2: #{tpu_custom_call.1} parent=1 // pred_check
      _
    $region3: #{tpu_custom_call.1} parent=1 // pred_check_branch
      %14 = sbr.rel (0) target = $region5
    $region4: #{tpu_custom_call.1} parent=1 // pred_region
      %s16 = ssub.s32 128, 128
      %17 = vsyncadd [#allocation3], %s16
      %s19 = sshll.u32 [#allocation2], 4
      %s20 = int_to_ptr.vmem [resolvable:$true] %s19
      %22 = dma.hbm_to_vmem [thread:$0]  %s0, 128, %s20, [#allocation3]
    $region5: #{tpu_custom_call.1} parent=1 // pred_fallthru
      _
    // Predicated region
    $region6: #{tpu_custom_call.1} parent=1 // pred_check
      _
    $region7: #{tpu_custom_call.1} parent=1 // pred_check_branch
      %24 = sbr.rel (0) target = $region9
    $region8: #{tpu_custom_call.1} parent=1 // pred_region
      %s26 = ssub.s32 2048, 2048
      %27 = vsyncadd [#allocation6], %s26
      %s28 = sshll.u32 [#allocation5], 4
      %s29 = int_to_ptr.vmem [resolvable:$true] %s28
      %34 = dma.hbm_to_vmem [thread:$0]  %s1, 2048, %s29, [#allocation6], 128, 128, 8
    $region9: #{tpu_custom_call.1} parent=1 // pred_fallthru
      _
    // Predicated region
    $region10: #{tpu_custom_call.1} parent=1 // pred_check
      _
    $region11: #{tpu_custom_call.1} parent=1 // pred_check_branch
      %36 = sbr.rel (0) target = $region13
    $region12: #{tpu_custom_call.1} parent=1 // pred_region
      _
    $region13: #{tpu_custom_call.1} parent=1 // pred_fallthru
      _
    // Predicated region
    $region14: #{tpu_custom_call.1} parent=1 // pred_check
      _
    $region15: #{tpu_custom_call.1} parent=1 // pred_check_branch
      %38 = sbr.rel (0) target = $region17
    $region16: #{tpu_custom_call.1} parent=1 // pred_region
      %s40 = ssub.s32 2048, 2048
      %41 = vsyncadd [#allocation6], %s40
      %s42 = sshll.u32 [#allocation7], 4
      %s43 = int_to_ptr.vmem [resolvable:$true] %s42
      %48 = dma.hbm_to_vmem [thread:$0]  %s3, 2048, %s43, [#allocation6], 128, 128, 8
    $region17: #{tpu_custom_call.1} parent=1 // pred_fallthru
      _
    // Predicated region
    $region18: #{tpu_custom_call.1} parent=1 // pred_check
      _
    $region19: #{tpu_custom_call.1} parent=1 // pred_check_branch
      %50 = sbr.rel (0) target = $region21
    $region20: #{tpu_custom_call.1} parent=1 // pred_region
      _
    $region21: #{tpu_custom_call.1} parent=1 // pred_fallthru
      _
    // Predicated region
    $region22: #{tpu_custom_call.1} parent=1 // pred_check
      _
    $region23: #{tpu_custom_call.1} parent=1 // pred_check_branch
      %52 = sbr.rel (0) target = $region25
    $region24: #{tpu_custom_call.1} parent=1 // pred_region
      %53 = dma.done [#allocation3], 128
    $region25: #{tpu_custom_call.1} parent=1 // pred_fallthru
      _
    // Predicated region
    $region26: #{tpu_custom_call.1} parent=1 // pred_check
      _
    $region27: #{tpu_custom_call.1} parent=1 // pred_check_branch
      %55 = sbr.rel (0) target = $region29
    $region28: #{tpu_custom_call.1} parent=1 // pred_region
      %56 = dma.done [#allocation6], 2048
    $region29: #{tpu_custom_call.1} parent=1 // pred_fallthru
      _
    // Predicated region
    $region30: #{tpu_custom_call.1} parent=1 // pred_check
      _
    $region31: #{tpu_custom_call.1} parent=1 // pred_check_branch
      %58 = sbr.rel (0) target = $region33
    $region32: #{tpu_custom_call.1} parent=1 // pred_region
      %59 = dma.done [#allocation6], 2048
    $region33: #{tpu_custom_call.1} parent=1 // pred_fallthru
      _
    %v60 = vld [vmem:[#allocation2] sm:$0xff]
    %v61 = vld [vmem:[#allocation5] sm:$0xff]
    %v62 = vld [vmem:[#allocation5 + $0x8] sm:$0xff]
    %v63 = vld [vmem:[#allocation5 + $0x10] sm:$0xff]
    %v64 = vld [vmem:[#allocation5 + $0x18] sm:$0xff]
    %v65 = vld [vmem:[#allocation5 + $0x20] sm:$0xff]
    %v66 = vld [vmem:[#allocation5 + $0x28] sm:$0xff]
    %v67 = vld [vmem:[#allocation5 + $0x30] sm:$0xff]
    %v68 = vld [vmem:[#allocation5 + $0x38] sm:$0xff]
    %v69 = vld [vmem:[#allocation5 + $0x40] sm:$0xff]
    %v70 = vld [vmem:[#allocation5 + $0x48] sm:$0xff]
    %v71 = vld [vmem:[#allocation5 + $0x50] sm:$0xff]
    %v72 = vld [vmem:[#allocation5 + $0x58] sm:$0xff]
    %v73 = vld [vmem:[#allocation5 + $0x60] sm:$0xff]
    %v74 = vld [vmem:[#allocation5 + $0x68] sm:$0xff]
    %v75 = vld [vmem:[#allocation5 + $0x70] sm:$0xff]
    %v76 = vld [vmem:[#allocation5 + $0x78] sm:$0xff]
    %v77 = vld [vmem:[%s2] sm:$0x1]
    %v79 = vlaneseq
    %v80 = vshrl.u32 %v79, 7
    %v81 = vsub.s32 0, %v80
    %v82 = vrot.slane %v77, %v81
    %84 = vmatprep.subr.mxu0 0.0
    %85 = vmatpush1.msra.mxu0 %v61
    %86 = vmatprep.subr.mxu0 0.0
    %87 = vmatpush1.msra.mxu0 %v62
    %88 = vmatprep.subr.mxu0 0.0
    %89 = vmatpush1.msra.mxu0 %v63
    %90 = vmatprep.subr.mxu0 0.0
    %91 = vmatpush1.msra.mxu0 %v64
    %92 = vmatprep.subr.mxu0 0.0
    %93 = vmatpush1.msra.mxu0 %v65
    %94 = vmatprep.subr.mxu0 0.0
    %95 = vmatpush1.msra.mxu0 %v66
    %96 = vmatprep.subr.mxu0 0.0
    %97 = vmatpush1.msra.mxu0 %v67
    %98 = vmatprep.subr.mxu0 0.0
    %99 = vmatpush1.msra.mxu0 %v68
    %100 = vmatprep.subr.mxu0 0.0
    %101 = vmatpush1.msra.mxu0 %v69
    %102 = vmatprep.subr.mxu0 0.0
    %103 = vmatpush1.msra.mxu0 %v70
    %104 = vmatprep.subr.mxu0 0.0
    %105 = vmatpush1.msra.mxu0 %v71
    %106 = vmatprep.subr.mxu0 0.0
    %107 = vmatpush1.msra.mxu0 %v72
    %108 = vmatprep.subr.mxu0 0.0
    %109 = vmatpush1.msra.mxu0 %v73
    %110 = vmatprep.subr.mxu0 0.0
    %111 = vmatpush1.msra.mxu0 %v74
    %112 = vmatprep.subr.mxu0 0.0
    %113 = vmatpush1.msra.mxu0 %v75
    %114 = vmatprep.subr.mxu0 0.0
    %115 = vmatpush1.msra.mxu0 %v76
    %116 = vmatprep.subr.mxu0 0.0
    %117 = vmatpush1.msra.mxu0 0.0
    %118 = vmatprep.subr.mxu0 0.0
    %119 = vmatpush1.msra.mxu0 0.0
    %120 = vmatprep.subr.mxu0 0.0
    %121 = vmatpush1.msra.mxu0 0.0
    %122 = vmatprep.subr.mxu0 0.0
    %123 = vmatpush1.msra.mxu0 0.0
    %124 = vmatprep.subr.mxu0 0.0
    %125 = vmatpush1.msra.mxu0 0.0
    %126 = vmatprep.subr.mxu0 0.0
    %127 = vmatpush1.msra.mxu0 0.0
    %128 = vmatprep.subr.mxu0 0.0
    %129 = vmatpush1.msra.mxu0 0.0
    %130 = vmatprep.subr.mxu0 0.0
    %131 = vmatpush1.msra.mxu0 0.0
    %132 = vmatprep.subr.mxu0 0.0
    %133 = vmatpush1.msra.mxu0 0.0
    %134 = vmatprep.subr.mxu0 0.0
    %135 = vmatpush1.msra.mxu0 0.0
    %136 = vmatprep.subr.mxu0 0.0
    %137 = vmatpush1.msra.mxu0 0.0
    %138 = vmatprep.subr.mxu0 0.0
    %139 = vmatpush1.msra.mxu0 0.0
    %140 = vmatprep.subr.mxu0 0.0
    %141 = vmatpush1.msra.mxu0 0.0
    %142 = vmatprep.subr.mxu0 0.0
    %143 = vmatpush1.msra.mxu0 0.0
    %144 = vmatprep.subr.mxu0 0.0
    %145 = vmatpush1.msra.mxu0 0.0
    %146 = vmatprep.subr.mxu0 0.0
    %147 = vmatpush1.msra.mxu0 0.0
    %148 = vmatprep.mubr.f32.mxu0 0.0
    %149 = vmatmul.mubr.f32.gmra.mrb[0].mxu0 %v60
    %v150 = vpop.f32.mrb[0].mxu0
    %v151 = vadd.f32 %v82, %v150
    %v152 = vpop.f32.mrb[0].mxu0
    %153 = vdwg.mxu0
    %v154 = vmax.f32 %v151, 0.0
    %v155 = vld [vmem:[#allocation7] sm:$0xff]
    %v156 = vld [vmem:[#allocation7 + $0x8] sm:$0xff]
    %v157 = vld [vmem:[#allocation7 + $0x10] sm:$0xff]
    %v158 = vld [vmem:[#allocation7 + $0x18] sm:$0xff]
    %v159 = vld [vmem:[#allocation7 + $0x20] sm:$0xff]
    %v160 = vld [vmem:[#allocation7 + $0x28] sm:$0xff]
    %v161 = vld [vmem:[#allocation7 + $0x30] sm:$0xff]
    %v162 = vld [vmem:[#allocation7 + $0x38] sm:$0xff]
    %v163 = vld [vmem:[#allocation7 + $0x40] sm:$0xff]
    %v164 = vld [vmem:[#allocation7 + $0x48] sm:$0xff]
    %v165 = vld [vmem:[#allocation7 + $0x50] sm:$0xff]
    %v166 = vld [vmem:[#allocation7 + $0x58] sm:$0xff]
    %v167 = vld [vmem:[#allocation7 + $0x60] sm:$0xff]
    %v168 = vld [vmem:[#allocation7 + $0x68] sm:$0xff]
    %v169 = vld [vmem:[#allocation7 + $0x70] sm:$0xff]
    %v170 = vld [vmem:[#allocation7 + $0x78] sm:$0xff]
    %v171 = vld [vmem:[%s4] sm:$0x1]
    %v173 = vlaneseq
    %v174 = vshrl.u32 %v173, 7
    %v175 = vsub.s32 0, %v174
    %v176 = vrot.slane %v171, %v175
    %178 = vmatprep.subr.mxu0 0.0
    %179 = vmatpush1.msra.mxu0 %v155
    %180 = vmatprep.subr.mxu0 0.0
    %181 = vmatpush1.msra.mxu0 %v156
    %182 = vmatprep.subr.mxu0 0.0
    %183 = vmatpush1.msra.mxu0 %v157
    %184 = vmatprep.subr.mxu0 0.0
    %185 = vmatpush1.msra.mxu0 %v158
    %186 = vmatprep.subr.mxu0 0.0
    %187 = vmatpush1.msra.mxu0 %v159
    %188 = vmatprep.subr.mxu0 0.0
    %189 = vmatpush1.msra.mxu0 %v160
    %190 = vmatprep.subr.mxu0 0.0
    %191 = vmatpush1.msra.mxu0 %v161
    %192 = vmatprep.subr.mxu0 0.0
    %193 = vmatpush1.msra.mxu0 %v162
    %194 = vmatprep.subr.mxu0 0.0
    %195 = vmatpush1.msra.mxu0 %v163
    %196 = vmatprep.subr.mxu0 0.0
    %197 = vmatpush1.msra.mxu0 %v164
    %198 = vmatprep.subr.mxu0 0.0
    %199 = vmatpush1.msra.mxu0 %v165
    %200 = vmatprep.subr.mxu0 0.0
    %201 = vmatpush1.msra.mxu0 %v166
    %202 = vmatprep.subr.mxu0 0.0
    %203 = vmatpush1.msra.mxu0 %v167
    %204 = vmatprep.subr.mxu0 0.0
    %205 = vmatpush1.msra.mxu0 %v168
    %206 = vmatprep.subr.mxu0 0.0
    %207 = vmatpush1.msra.mxu0 %v169
    %208 = vmatprep.subr.mxu0 0.0
    %209 = vmatpush1.msra.mxu0 %v170
    %210 = vmatprep.subr.mxu0 0.0
    %211 = vmatpush1.msra.mxu0 0.0
    %212 = vmatprep.subr.mxu0 0.0
    %213 = vmatpush1.msra.mxu0 0.0
    %214 = vmatprep.subr.mxu0 0.0
    %215 = vmatpush1.msra.mxu0 0.0
    %216 = vmatprep.subr.mxu0 0.0
    %217 = vmatpush1.msra.mxu0 0.0
    %218 = vmatprep.subr.mxu0 0.0
    %219 = vmatpush1.msra.mxu0 0.0
    %220 = vmatprep.subr.mxu0 0.0
    %221 = vmatpush1.msra.mxu0 0.0
    %222 = vmatprep.subr.mxu0 0.0
    %223 = vmatpush1.msra.mxu0 0.0
    %224 = vmatprep.subr.mxu0 0.0
    %225 = vmatpush1.msra.mxu0 0.0
    %226 = vmatprep.subr.mxu0 0.0
    %227 = vmatpush1.msra.mxu0 0.0
    %228 = vmatprep.subr.mxu0 0.0
    %229 = vmatpush1.msra.mxu0 0.0
    %230 = vmatprep.subr.mxu0 0.0
    %231 = vmatpush1.msra.mxu0 0.0
    %232 = vmatprep.subr.mxu0 0.0
    %233 = vmatpush1.msra.mxu0 0.0
    %234 = vmatprep.subr.mxu0 0.0
    %235 = vmatpush1.msra.mxu0 0.0
    %236 = vmatprep.subr.mxu0 0.0
    %237 = vmatpush1.msra.mxu0 0.0
    %238 = vmatprep.subr.mxu0 0.0
    %239 = vmatpush1.msra.mxu0 0.0
    %240 = vmatprep.subr.mxu0 0.0
    %241 = vmatpush1.msra.mxu0 0.0
    %242 = vmatprep.mubr.f32.mxu0 0.0
    %243 = vmatmul.mubr.f32.gmra.mrb[0].mxu0 %v154
    %v244 = vpop.f32.mrb[0].mxu0
    %v245 = vadd.f32 %v176, %v244
    %v246 = vpop.f32.mrb[0].mxu0
    %247 = vdwg.mxu0
    %v248 = vmax.f32 %v245, 0.0
    %v249 = vadd.f32 %v248, %v60
    %250 = vst [vmem:[#allocation8] sm:$0xff] %v249
    // Predicated region
    $region34: #{tpu_custom_call.1} parent=1 // pred_check
      _
    $region35: #{tpu_custom_call.1} parent=1 // pred_check_branch
      %252 = sbr.rel (0) target = $region37
    $region36: #{tpu_custom_call.1} parent=1 // pred_region
      %s254 = ssub.s32 128, 128
      %255 = vsyncadd [#allocation4], %s254
      %s257 = sshll.u32 [#allocation8], 4
      %s258 = int_to_ptr.vmem [resolvable:$true] %s257
      %260 = dma.vmem_to_hbm [thread:$0]  %s258, 128, %s5, [#allocation4]
    $region37: #{tpu_custom_call.1} parent=1 // pred_fallthru
      _
    // Predicated region
    $region38: #{tpu_custom_call.1} parent=1 // pred_check
      _
    $region39: #{tpu_custom_call.1} parent=1 // pred_check_branch
      %262 = sbr.rel (0) target = $region41
    $region40: #{tpu_custom_call.1} parent=1 // pred_region
      %263 = dma.done [#allocation4], 128
    $region41: #{tpu_custom_call.1} parent=1 // pred_fallthru
      _
    %264 = vsyncpa [#allocation3], 1
    %265 = vsyncpa [#allocation6], 1
    %266 = vsyncpa [#allocation4], 1

</llo_original>
